<compile_context>
chip_gen: v7x
topology: tpu7x:2x2x1
jax: 0.10.0
libtpu: 0.0.40
codegen_flags: <defaults>
</compile_context>

<pallas_src>
import math

import jax
import jax.numpy as jnp
from jax import lax
from jax.experimental import pallas as pl
from jax.experimental.pallas import tpu as pltpu

_VMEM_LIMIT = 32 * 1024 * 1024  # safe on v5e/v6e/v7x; our tiles stay far below it.


def _pick_tile(dim, pref, align):
    """Largest tile <= pref that divides `dim` and is a multiple of `align`.
    Falls back to the full dim (block dim == array dim is always legal)."""
    if dim <= pref:
        return dim
    t = (pref // align) * align
    while t >= align:
        if dim % t == 0:
            return t
        t -= align
    return dim


# ---------------------------------------------------------------------------
# Pallas kernels
# ---------------------------------------------------------------------------

def pallas_linear(x, w, b, activation=None, residual=None):
    """y = [residual +] act(x @ w + b).  Tiled (M, N, K) matmul with f32 accumulator.
    x: (M, K) f32, w: (K, N) f32 (cast to bf16 for the MXU), b: (N,)."""
    M, K = x.shape
    N = w.shape[1]
    tm = _pick_tile(M, 256, 8)
    tn = _pick_tile(N, 256, 128)
    tk = _pick_tile(K, 512, 128)
    w_bf = w.astype(jnp.bfloat16)
    b2 = b.reshape(1, N)
    has_res = residual is not None

    def kernel(x_ref, w_ref, b_ref, *args):
        if has_res:
            r_ref, o_ref, acc_ref = args
        else:
            o_ref, acc_ref = args
        kidx = pl.program_id(2)

        @pl.when(kidx == 0)
        def _():
            acc_ref[...] = jnp.zeros_like(acc_ref)

        acc_ref[...] += jnp.dot(x_ref[...].astype(jnp.bfloat16), w_ref[...],
                                preferred_element_type=jnp.float32)

        @pl.when(kidx == pl.num_programs(2) - 1)
        def _():
            y = acc_ref[...] + b_ref[...]
            if activation == "gelu":
                # TODO(synk): PyTorch nn.GELU defaults to exact erf; tanh approx here.
                y = jax.nn.gelu(y, approximate=True)
            if has_res:
                y = y + r_ref[...]
            o_ref[...] = y

    in_specs = [
        pl.BlockSpec((tm, tk), lambda i, j, k: (i, k)),
        pl.BlockSpec((tk, tn), lambda i, j, k: (k, j)),
        pl.BlockSpec((1, tn), lambda i, j, k: (0, j)),
    ]
    inputs = [x, w_bf, b2]
    if has_res:
        in_specs.append(pl.BlockSpec((tm, tn), lambda i, j, k: (i, j)))
        inputs.append(residual)

    return pl.pallas_call(
        kernel,
        grid=(M // tm, N // tn, K // tk),
        in_specs=in_specs,
        out_specs=pl.BlockSpec((tm, tn), lambda i, j, k: (i, j)),
        out_shape=jax.ShapeDtypeStruct((M, N), jnp.float32),
        scratch_shapes=[pltpu.VMEM((tm, tn), jnp.float32)],
        compiler_params=pltpu.CompilerParams(
            dimension_semantics=("parallel", "parallel", "arbitrary"),
            vmem_limit_bytes=_VMEM_LIMIT),
    )(*inputs)


def pallas_layernorm(x, gamma, beta, eps=1e-5):
    """LayerNorm over the last dim, tiled over rows.  x: (M, C)."""
    M, C = x.shape
    tm = _pick_tile(M, 512, 8)
    g2 = gamma.reshape(1, C)
    b2 = beta.reshape(1, C)

    def kernel(x_ref, g_ref, b_ref, o_ref):
        xv = x_ref[...]
        mu = jnp.mean(xv, axis=-1, keepdims=True)
        var = jnp.mean(jnp.square(xv - mu), axis=-1, keepdims=True)
        o_ref[...] = (xv - mu) * lax.rsqrt(var + eps) * g_ref[...] + b_ref[...]

    return pl.pallas_call(
        kernel,
        grid=(M // tm,),
        in_specs=[
            pl.BlockSpec((tm, C), lambda i: (i, 0)),
            pl.BlockSpec((1, C), lambda i: (0, 0)),
            pl.BlockSpec((1, C), lambda i: (0, 0)),
        ],
        out_specs=pl.BlockSpec((tm, C), lambda i: (i, 0)),
        out_shape=jax.ShapeDtypeStruct((M, C), jnp.float32),
        compiler_params=pltpu.CompilerParams(
            dimension_semantics=("parallel",),
            vmem_limit_bytes=_VMEM_LIMIT),
    )(x, g2, b2)


def pallas_ln_linear(x, gamma, beta, w, b, eps=1e-5):
    """Fused y = LayerNorm(x) @ w + b.  LN needs the full feature dim per row tile,
    so K is not tiled (fine for these channel widths)."""
    M, K = x.shape
    N = w.shape[1]
    tm = _pick_tile(M, 256, 8)
    tn = _pick_tile(N, 256, 128)
    w_bf = w.astype(jnp.bfloat16)
    g2 = gamma.reshape(1, K)
    bt2 = beta.reshape(1, K)
    b2 = b.reshape(1, N)

    def kernel(x_ref, g_ref, bt_ref, w_ref, bias_ref, o_ref):
        xv = x_ref[...]
        mu = jnp.mean(xv, axis=-1, keepdims=True)
        var = jnp.mean(jnp.square(xv - mu), axis=-1, keepdims=True)
        h = (xv - mu) * lax.rsqrt(var + eps) * g_ref[...] + bt_ref[...]
        o_ref[...] = jnp.dot(h.astype(jnp.bfloat16), w_ref[...],
                             preferred_element_type=jnp.float32) + bias_ref[...]

    return pl.pallas_call(
        kernel,
        grid=(M // tm, N // tn),
        in_specs=[
            pl.BlockSpec((tm, K), lambda i, j: (i, 0)),
            pl.BlockSpec((1, K), lambda i, j: (0, 0)),
            pl.BlockSpec((1, K), lambda i, j: (0, 0)),
            pl.BlockSpec((K, tn), lambda i, j: (0, j)),
            pl.BlockSpec((1, tn), lambda i, j: (0, j)),
        ],
        out_specs=pl.BlockSpec((tm, tn), lambda i, j: (i, j)),
        out_shape=jax.ShapeDtypeStruct((M, N), jnp.float32),
        compiler_params=pltpu.CompilerParams(
            dimension_semantics=("parallel", "parallel"),
            vmem_limit_bytes=_VMEM_LIMIT),
    )(x, g2, bt2, w_bf, b2)


def pallas_ln_mlp(x, gamma, beta, w1, b1, w2, b2, eps=1e-5):
    """Fused out = x + fc2(GELU(fc1(LayerNorm(x)))).  Weights fully VMEM-resident.
    # TODO(synk): for very large dims (>~1k channels) the fc weights need K/N tiling.
    """
    M, C = x.shape
    Hd = w1.shape[1]
    tm = _pick_tile(M, 256, 8)
    w1_bf = w1.astype(jnp.bfloat16)
    w2_bf = w2.astype(jnp.bfloat16)
    g2 = gamma.reshape(1, C)
    bt2 = beta.reshape(1, C)
    b1_2 = b1.reshape(1, Hd)
    b2_2 = b2.reshape(1, C)

    def kernel(x_ref, g_ref, bt_ref, w1_ref, b1_ref, w2_ref, b2_ref, o_ref):
        xv = x_ref[...]
        mu = jnp.mean(xv, axis=-1, keepdims=True)
        var = jnp.mean(jnp.square(xv - mu), axis=-1, keepdims=True)
        h = (xv - mu) * lax.rsqrt(var + eps) * g_ref[...] + bt_ref[...]
        h1 = jnp.dot(h.astype(jnp.bfloat16), w1_ref[...],
                     preferred_element_type=jnp.float32) + b1_ref[...]
        # TODO(synk): PyTorch nn.GELU defaults to exact erf; tanh approx here.
        h1 = jax.nn.gelu(h1, approximate=True)
        h2 = jnp.dot(h1.astype(jnp.bfloat16), w2_ref[...],
                     preferred_element_type=jnp.float32) + b2_ref[...]
        o_ref[...] = xv + h2  # residual (dropout == identity at inference)

    return pl.pallas_call(
        kernel,
        grid=(M // tm,),
        in_specs=[
            pl.BlockSpec((tm, C), lambda i: (i, 0)),
            pl.BlockSpec((1, C), lambda i: (0, 0)),
            pl.BlockSpec((1, C), lambda i: (0, 0)),
            pl.BlockSpec((C, Hd), lambda i: (0, 0)),
            pl.BlockSpec((1, Hd), lambda i: (0, 0)),
            pl.BlockSpec((Hd, C), lambda i: (0, 0)),
            pl.BlockSpec((1, C), lambda i: (0, 0)),
        ],
        out_specs=pl.BlockSpec((tm, C), lambda i: (i, 0)),
        out_shape=jax.ShapeDtypeStruct((M, C), jnp.float32),
        compiler_params=pltpu.CompilerParams(
            dimension_semantics=("parallel",),
            vmem_limit_bytes=_VMEM_LIMIT),
    )(x, g2, bt2, w1_bf, b1_2, w2_bf, b2_2)


def flash_attention(q, k, v, *, img_h, img_w, kernel_size, scale):
    """Flash attention with online softmax.  q/k/v: (B*heads, T, Dh) with T = img_h*img_w.
    kernel_size=None -> global (unmasked) attention; otherwise NATTEN neighborhood
    attention with the mask generated in-kernel from iota (no dense T x T mask)."""
    BH, T, Dh = q.shape
    tq = _pick_tile(T, 128, 8)
    tk = _pick_tile(T, 128, 8)
    nk = T // tk
    NEG = -1e30
    half = (kernel_size // 2) if kernel_size is not None else 0

    q = q.astype(jnp.bfloat16)
    k = k.astype(jnp.bfloat16)
    v = v.astype(jnp.bfloat16)

    def kernel(q_ref, k_ref, v_ref, o_ref, m_sc, l_sc, acc_sc):
        qi = pl.program_id(1)
        ki = pl.program_id(2)

        @pl.when(ki == 0)
        def _():
            m_sc[...] = jnp.full_like(m_sc, NEG)
            l_sc[...] = jnp.zeros_like(l_sc)
            acc_sc[...] = jnp.zeros_like(acc_sc)

        def compute():
            # scale folded into q (touches tq*Dh, not tq*tk elements)
            s = jnp.dot(q_ref[0] * scale, k_ref[0].T,
                        preferred_element_type=jnp.float32)          # (tq, tk) f32
            if kernel_size is not None:
                qpos = qi * tq + lax.broadcasted_iota(jnp.int32, (tq, tk), 0)
                kpos = ki * tk + lax.broadcasted_iota(jnp.int32, (tq, tk), 1)
                qr, qc = qpos // img_w, qpos % img_w
                kr, kc = kpos // img_w, kpos % img_w
                si = jnp.clip(qr - half, 0, img_h - kernel_size)
                sj = jnp.clip(qc - half, 0, img_w - kernel_size)
                mask = ((kr >= si) & (kr < si + kernel_size)
                        & (kc >= sj) & (kc < sj + kernel_size))
                s = jnp.where(mask, s, NEG)
            m_prev = m_sc[...]
            m_new = jnp.maximum(m_prev, jnp.max(s, axis=-1, keepdims=True))
            alpha = jnp.exp(m_prev - m_new)
            p = jnp.exp(s - m_new)
            if kernel_size is not None:
                p = jnp.where(mask, p, 0.0)                          # NaN-safe masking
            l_sc[...] = alpha * l_sc[...] + jnp.sum(p, axis=-1, keepdims=True)
            acc_sc[...] = alpha * acc_sc[...] + jnp.dot(
                p.astype(jnp.bfloat16), v_ref[0],
                preferred_element_type=jnp.float32)
            m_sc[...] = m_new

        if kernel_size is not None:
            # Skip KV tiles that cannot contain any key inside the neighborhood
            # window of any query in this q-tile (conservative image-row bound).
            q0 = qi * tq
            row_lo = q0 // img_w
            row_hi = (q0 + tq - 1) // img_w
            si_lo = jnp.clip(row_lo - half, 0, img_h - kernel_size)
            si_hi = jnp.clip(row_hi - half, 0, img_h - kernel_size)
            k_lo = si_lo * img_w
            k_hi = (si_hi + kernel_size) * img_w
            kv0 = ki * tk
            overlaps = jnp.logical_and(kv0 < k_hi, kv0 + tk > k_lo)
            pl.when(overlaps)(compute)
        else:
            compute()

        @pl.when(ki == nk - 1)
        def _():
            o_ref[0] = (acc_sc[...] *
                        pl.reciprocal(l_sc[...], approx=True)).astype(o_ref.dtype)

    return pl.pallas_call(
        kernel,
        grid=(BH, T // tq, nk),
        in_specs=[
            pl.BlockSpec((1, tq, Dh), lambda b, i, j: (b, i, 0)),
            pl.BlockSpec((1, tk, Dh), lambda b, i, j: (b, j, 0)),
            pl.BlockSpec((1, tk, Dh), lambda b, i, j: (b, j, 0)),
        ],
        out_specs=pl.BlockSpec((1, tq, Dh), lambda b, i, j: (b, i, 0)),
        out_shape=jax.ShapeDtypeStruct((BH, T, Dh), jnp.float32),
        scratch_shapes=[
            pltpu.VMEM((tq, 1), jnp.float32),   # running max
            pltpu.VMEM((tq, 1), jnp.float32),   # running denom
            pltpu.VMEM((tq, Dh), jnp.float32),  # running output accumulator
        ],
        compiler_params=pltpu.CompilerParams(
            dimension_semantics=("parallel", "parallel", "arbitrary"),
            vmem_limit_bytes=_VMEM_LIMIT),
    )(q, k, v)


# ---------------------------------------------------------------------------
# Module building blocks (glue in JAX, compute in Pallas kernels above)
# ---------------------------------------------------------------------------

def downsample_block(x, params, factor):
    """Space-to-depth by `factor` followed by a Linear projection (shortcut=False)."""
    B, H, W, C = x.shape
    x = x.reshape(B, H // factor, factor, W // factor, factor, C)
    x = x.transpose(0, 1, 3, 2, 4, 5).reshape(B, H // factor, W // factor,
                                              factor * factor * C)
    x2 = x.reshape(-1, factor * factor * C)
    y = pallas_linear(x2, params["w"], params["b"])
    return y.reshape(B, H // factor, W // factor, -1)


def attention_block(x, p, H, W, head_dim, kernel_size):
    """Pre-LN attention block: x += proj(attn(qkv(LN(x)))); x += MLP(LN(x)).
    kernel_size=None -> global attention, else NATTEN neighborhood attention."""
    B, _, _, C = x.shape
    T = H * W
    nh = C // head_dim
    x2 = x.reshape(B * T, C)

    # fused LayerNorm + QKV projection
    qkv = pallas_ln_linear(x2, p["norm1_g"], p["norm1_b"], p["qkv_w"], p["qkv_b"])
    qkv = qkv.reshape(B, T, 3, nh, head_dim).transpose(2, 0, 3, 1, 4)
    qkv = qkv.reshape(3, B * nh, T, head_dim)
    o = flash_attention(qkv[0], qkv[1], qkv[2], img_h=H, img_w=W,
                        kernel_size=kernel_size, scale=1.0 / math.sqrt(head_dim))
    o = o.reshape(B, nh, T, head_dim).transpose(0, 2, 1, 3).reshape(B * T, C)

    # fused output projection + residual add (dropout == identity at inference)
    x2 = pallas_linear(o, p["proj_w"], p["proj_b"], residual=x2)

    # fused LayerNorm + fc1 + GELU + fc2 + residual
    x2 = pallas_ln_mlp(x2, p["norm2_g"], p["norm2_b"],
                       p["fc1_w"], p["fc1_b"], p["fc2_w"], p["fc2_b"])
    return x2.reshape(B, H, W, C)


# ---------------------------------------------------------------------------
# Parameter init (deterministic, synthetic)
# ---------------------------------------------------------------------------

def _normal(key, shape, scale=0.02):
    return scale * jax.random.normal(key, shape, jnp.float32)


def init_attention_block(key, dim):
    ks = jax.random.split(key, 4)
    mlp = 4 * dim
    return dict(
        norm1_g=jnp.ones((dim,), jnp.float32), norm1_b=jnp.zeros((dim,), jnp.float32),
        qkv_w=_normal(ks[0], (dim, 3 * dim)), qkv_b=jnp.zeros((3 * dim,), jnp.float32),
        proj_w=_normal(ks[1], (dim, dim)), proj_b=jnp.zeros((dim,), jnp.float32),
        norm2_g=jnp.ones((dim,), jnp.float32), norm2_b=jnp.zeros((dim,), jnp.float32),
        fc1_w=_normal(ks[2], (dim, mlp)), fc1_b=jnp.zeros((mlp,), jnp.float32),
        fc2_w=_normal(ks[3], (mlp, dim)), fc2_b=jnp.zeros((dim,), jnp.float32),
    )


def init_params(key, cfg):
    enc_dims = [cfg["base_dim"] * m for m in cfg["dim_mults"]]
    n_levels = len(cfg["dim_mults"])
    keys = jax.random.split(key, 2 + 2 * n_levels)
    p = {}
    k_in = cfg["input_channels"] * cfg["patch_size"] ** 2
    p["patch_embed"] = dict(w=_normal(keys[0], (k_in, enc_dims[0])),
                            b=jnp.zeros((enc_dims[0],), jnp.float32))
    p["norm_g"] = jnp.ones((enc_dims[0],), jnp.float32)
    p["norm_b"] = jnp.zeros((enc_dims[0],), jnp.float32)
    levels = []
    for i in range(n_levels):
        lkeys = jax.random.split(keys[2 + i], cfg["depths"][i] + 1)
        blocks = [init_attention_block(lkeys[d], enc_dims[i])
                  for d in range(cfg["depths"][i])]
        level = dict(blocks=blocks)
        if i != n_levels - 1:
            k_down = enc_dims[i] * 4  # factor=2 space-to-depth
            level["down"] = dict(w=_normal(lkeys[-1], (k_down, enc_dims[i + 1])),
                                 b=jnp.zeros((enc_dims[i + 1],), jnp.float32))
        levels.append(level)
    p["levels"] = levels
    p["latent_w"] = _normal(keys[1], (enc_dims[-1], cfg["latent_dim"]))
    p["latent_b"] = jnp.zeros((cfg["latent_dim"],), jnp.float32)
    return p


# ---------------------------------------------------------------------------
# Full forward pass (mirrors HViTEncoder.forward)
# ---------------------------------------------------------------------------

def hvit_encoder_forward(params, x, cfg):
    # x: (B, C, H, W)  NCHW
    x = jnp.transpose(x, (0, 2, 3, 1))                     # -> NHWC, like PyTorch forward
    x = downsample_block(x, params["patch_embed"], cfg["patch_size"])
    B, H, W, C = x.shape
    x = pallas_layernorm(x.reshape(-1, C), params["norm_g"],
                         params["norm_b"]).reshape(B, H, W, C)

    n_levels = len(cfg["dim_mults"])
    cur_h, cur_w = H, W
    for i in range(n_levels):
        is_global = (i == n_levels - 1)
        level = params["levels"][i]
        ks = None if is_global else cfg["kernel_size"]
        for blk in level["blocks"]:
            x = attention_block(x, blk, cur_h, cur_w, cfg["head_dim"], ks)
        if not is_global:
            x = downsample_block(x, level["down"], 2)
            cur_h //= 2
            cur_w //= 2

    Cf = x.shape[-1]
    z = pallas_linear(x.reshape(-1, Cf), params["latent_w"], params["latent_b"])
    return z.reshape(x.shape[0], cur_h, cur_w, cfg["latent_dim"])


# ---------------------------------------------------------------------------

if __name__ == "__main__":
    cfg = dict(
        image_size=16,
        input_channels=3,
        patch_size=2,
        latent_dim=8,
        base_dim=32,
        dim_mults=(1, 2),
        depths=(1, 1),
        head_dim=16,
        kernel_size=3,
        dropout=0.1,     # identity at inference
    )
    key = jax.random.PRNGKey(0)
    pkey, xkey = jax.random.split(key)
    params = init_params(pkey, cfg)
    x = jax.random.normal(
        xkey, (2, cfg["input_channels"], cfg["image_size"], cfg["image_size"]),
        jnp.float32)

    z = hvit_encoder_forward(params, x, cfg)
    z = jax.block_until_ready(z)

    latent_size = (cfg["image_size"] // cfg["patch_size"]) // 2 ** (len(cfg["dim_mults"]) - 1)
    assert z.shape == (2, latent_size, latent_size, cfg["latent_dim"]), z.shape
    assert bool(jnp.all(jnp.isfinite(z)))
    print("KERNEL_OK")
</pallas_src>

<mosaic_0001>
module attributes {stable_mosaic.version = 11 : i64} {
  func.func @kernel(%arg0: i32, %arg1: i32, %arg2: i32, %arg3: memref<128x12xf32, #tpu.memory_space<vmem>>, %arg4: memref<12x32xbf16, #tpu.memory_space<vmem>>, %arg5: memref<1x32xf32, #tpu.memory_space<vmem>>, %arg6: memref<128x32xf32, #tpu.memory_space<vmem>>, %arg7: memref<128x32xf32, #tpu.memory_space<vmem>>) attributes {dimension_semantics = [#tpu.dimension_semantics<parallel>, #tpu.dimension_semantics<parallel>, #tpu.dimension_semantics<arbitrary>], iteration_bounds = array<i64: 1, 1, 1>, scalar_prefetch = 0 : i64, scratch_operands = 1 : i64, tpu.core_type = #tpu.core_type<tc>, window_params = [{transform_indices = @transform_0, window_bounds = array<i64: 128, 12>}, {transform_indices = @transform_1, window_bounds = array<i64: 12, 32>}, {transform_indices = @transform_2, window_bounds = array<i64: 1, 32>}, {transform_indices = @transform_3, window_bounds = array<i64: 128, 32>}]} {
    %c0_i32 = arith.constant 0 : i32
    %0 = arith.cmpi eq, %arg2, %c0_i32 : i32
    %1 = arith.extui %0 : i1 to i32
    %c0_i32_0 = arith.constant 0 : i32
    %2 = arith.cmpi ne, %1, %c0_i32_0 : i32
    scf.if %2 {
      %cst_10 = arith.constant 0.000000e+00 : f32
      %13 = vector.broadcast %cst_10 : f32 to vector<128x32xf32>
      %c0_11 = arith.constant 0 : index
      %c0_12 = arith.constant 0 : index
      %14 = vector.load %arg7[%c0_11, %c0_12] : memref<128x32xf32, #tpu.memory_space<vmem>>, vector<128x32xf32>
      tpu.vector_store %arg7[%c0_11, %c0_12], %13 {strides = array<i32>} : memref<128x32xf32, #tpu.memory_space<vmem>>, vector<128x32xf32>,
    } else {
    }
    %c0 = arith.constant 0 : index
    %c0_1 = arith.constant 0 : index
    %3 = vector.load %arg7[%c0, %c0_1] : memref<128x32xf32, #tpu.memory_space<vmem>>, vector<128x32xf32>
    %c0_2 = arith.constant 0 : index
    %c0_3 = arith.constant 0 : index
    %4 = vector.load %arg3[%c0_2, %c0_3] : memref<128x12xf32, #tpu.memory_space<vmem>>, vector<128x12xf32>
    %5 = arith.truncf %4 : vector<128x12xf32> to vector<128x12xbf16>
    %c0_4 = arith.constant 0 : index
    %c0_5 = arith.constant 0 : index
    %6 = vector.load %arg4[%c0_4, %c0_5] : memref<12x32xbf16, #tpu.memory_space<vmem>>, vector<12x32xbf16>
    %cst = arith.constant dense<0.000000e+00> : vector<128x32xf32>
    %7 = tpu.matmul %5, %6, %cst {dimension_numbers = #tpu.dot_dimension_numbers<[1], [0], [0], [1], [0, 0, 1, 1], [], []>} : vector<128x12xbf16>, vector<12x32xbf16>, vector<128x32xf32> -> vector<128x32xf32>
    %8 = arith.addf %3, %7 : vector<128x32xf32>
    %c0_6 = arith.constant 0 : index
    %c0_7 = arith.constant 0 : index
    %9 = vector.load %arg7[%c0_6, %c0_7] : memref<128x32xf32, #tpu.memory_space<vmem>>, vector<128x32xf32>
    tpu.vector_store %arg7[%c0_6, %c0_7], %8 {strides = array<i32>} : memref<128x32xf32, #tpu.memory_space<vmem>>, vector<128x32xf32>,
    %c0_i32_8 = arith.constant 0 : i32
    %10 = arith.cmpi eq, %arg2, %c0_i32_8 : i32
    %11 = arith.extui %10 : i1 to i32
    %c0_i32_9 = arith.constant 0 : i32
    %12 = arith.cmpi ne, %11, %c0_i32_9 : i32
    scf.if %12 {
      %c0_10 = arith.constant 0 : index
      %c0_11 = arith.constant 0 : index
      %13 = vector.load %arg7[%c0_10, %c0_11] : memref<128x32xf32, #tpu.memory_space<vmem>>, vector<128x32xf32>
      %c0_12 = arith.constant 0 : index
      %c0_13 = arith.constant 0 : index
      %14 = vector.load %arg5[%c0_12, %c0_13] : memref<1x32xf32, #tpu.memory_space<vmem>>, vector<1x32xf32>
      %15 = vector.broadcast %14 : vector<1x32xf32> to vector<128x32xf32>
      %16 = arith.addf %13, %15 : vector<128x32xf32>
      %c0_14 = arith.constant 0 : index
      %c0_15 = arith.constant 0 : index
      %17 = vector.load %arg6[%c0_14, %c0_15] : memref<128x32xf32, #tpu.memory_space<vmem>>, vector<128x32xf32>
      tpu.vector_store %arg6[%c0_14, %c0_15], %16 {strides = array<i32>} : memref<128x32xf32, #tpu.memory_space<vmem>>, vector<128x32xf32>,
    } else {
    }
    return
  }
  func.func @transform_0(%arg0: i32, %arg1: i32, %arg2: i32) -> (i32, i32) {
    %c0_i32 = arith.constant 0 : i32
    return %arg0, %arg2 : i32, i32
  }
  func.func @transform_1(%arg0: i32, %arg1: i32, %arg2: i32) -> (i32, i32) {
    %c0_i32 = arith.constant 0 : i32
    return %arg2, %arg1 : i32, i32
  }
  func.func @transform_2(%arg0: i32, %arg1: i32, %arg2: i32) -> (i32, i32) {
    %c0_i32 = arith.constant 0 : i32
    %c0_i32_0 = arith.constant 0 : i32
    return %c0_i32, %arg1 : i32, i32
  }
  func.func @transform_3(%arg0: i32, %arg1: i32, %arg2: i32) -> (i32, i32) {
    %c0_i32 = arith.constant 0 : i32
    return %arg0, %arg1 : i32, i32
  }
}

</mosaic_0001>

<llo_original>
// kernel: tpu_custom_call.1
$region0: #{tpu_custom_call.1}
  #allocation0 [shape = 'u32[]', space=smem, size = 0x4, offset = 0x4, fixed_abs, tag = 'smem constant byte address 0x4 - core index']
  #allocation1 [shape = 'u32[144,128]{1,0:T(1,128)}', space=vmem, size = 0x12000, scoped, tag = 'internal scratch']
  #allocation2 [shape = 'f32[128,32]{1,0:T(8,128)}', space=vmem, size = 0x10000, scoped, tag = 'scratch operand']
  %s0 = inlined_call_operand.vmem [shape: f32[128,12], index: 0, kind: input, shape index: {}]
  %s1 = inlined_call_operand.vmem [shape: bf16[12,32], index: 1, kind: input, shape index: {}]
  %s2 = inlined_call_operand.vmem [shape: f32[1,32], index: 2, kind: input, shape index: {}]
  %s3 = inlined_call_operand.vmem [shape: f32[128,32], index: 3, kind: output, shape index: {}]
  %s4 = sld [smem:[#allocation0]]
  $region30: #{tpu_custom_call.1} parent=0
    _
  %s6 = ssub.s32 1, %s4
  %s7 = scalar_select 0, %s6, %s4
  // Predicated region
  $region2: #{tpu_custom_call.1} parent=0 // pred_check
    _
  $region3: #{tpu_custom_call.1} parent=0 // pred_check_branch
    %9 = sbr.rel (0) target = $region5
  $region4: #{tpu_custom_call.1} parent=0 // pred_region
    _
  $region5: #{tpu_custom_call.1} parent=0 // pred_fallthru
    _
  // Predicated region
  $region6: #{tpu_custom_call.1} parent=0 // pred_check
    _
  $region7: #{tpu_custom_call.1} parent=0 // pred_check_branch
    %11 = sbr.rel (0) target = $region9
  $region8: #{tpu_custom_call.1} parent=0 // pred_region
    _
  $region9: #{tpu_custom_call.1} parent=0 // pred_fallthru
    _
  // Predicated region
  $region10: #{tpu_custom_call.1} parent=0 // pred_check
    _
  $region11: #{tpu_custom_call.1} parent=0 // pred_check_branch
    %13 = sbr.rel (0) target = $region13
  $region12: #{tpu_custom_call.1} parent=0 // pred_region
    _
  $region13: #{tpu_custom_call.1} parent=0 // pred_fallthru
    _
  %p15 = scmp.eq.s32.totalorder 0, 0
  // Predicated region
  $region14: #{tpu_custom_call.1} parent=0 // pred_check
    %p16 = pneg %p15
  $region15: #{tpu_custom_call.1} parent=0 // pred_check_branch
    %18 = sbr.rel (%p16) target = $region17
  $region16: #{tpu_custom_call.1} parent=0 // pred_region
    %vm19 = vcmask 261120
    %20 = vst.msk [vmem:[#allocation2] sm:$0xff] %vm19, 0.0
    %21 = vst.msk [vmem:[#allocation2 + $0x8] sm:$0xff] %vm19, 0.0
    %22 = vst.msk [vmem:[#allocation2 + $0x10] sm:$0xff] %vm19, 0.0
    %23 = vst.msk [vmem:[#allocation2 + $0x18] sm:$0xff] %vm19, 0.0
    %24 = vst.msk [vmem:[#allocation2 + $0x20] sm:$0xff] %vm19, 0.0
    %25 = vst.msk [vmem:[#allocation2 + $0x28] sm:$0xff] %vm19, 0.0
    %26 = vst.msk [vmem:[#allocation2 + $0x30] sm:$0xff] %vm19, 0.0
    %27 = vst.msk [vmem:[#allocation2 + $0x38] sm:$0xff] %vm19, 0.0
    %28 = vst.msk [vmem:[#allocation2 + $0x40] sm:$0xff] %vm19, 0.0
    %29 = vst.msk [vmem:[#allocation2 + $0x48] sm:$0xff] %vm19, 0.0
    %30 = vst.msk [vmem:[#allocation2 + $0x50] sm:$0xff] %vm19, 0.0
    %31 = vst.msk [vmem:[#allocation2 + $0x58] sm:$0xff] %vm19, 0.0
    %32 = vst.msk [vmem:[#allocation2 + $0x60] sm:$0xff] %vm19, 0.0
    %33 = vst.msk [vmem:[#allocation2 + $0x68] sm:$0xff] %vm19, 0.0
    %34 = vst.msk [vmem:[#allocation2 + $0x70] sm:$0xff] %vm19, 0.0
    %35 = vst.msk [vmem:[#allocation2 + $0x78] sm:$0xff] %vm19, 0.0
  $region17: #{tpu_custom_call.1} parent=0 // pred_fallthru
    _
  %v36 = vld [vmem:[#allocation2] sm:$0xff]
  %v37 = vld [vmem:[#allocation2 + $0x8] sm:$0xff]
  %v38 = vld [vmem:[#allocation2 + $0x10] sm:$0xff]
  %v39 = vld [vmem:[#allocation2 + $0x18] sm:$0xff]
  %v40 = vld [vmem:[#allocation2 + $0x20] sm:$0xff]
  %v41 = vld [vmem:[#allocation2 + $0x28] sm:$0xff]
  %v42 = vld [vmem:[#allocation2 + $0x30] sm:$0xff]
  %v43 = vld [vmem:[#allocation2 + $0x38] sm:$0xff]
  %v44 = vld [vmem:[#allocation2 + $0x40] sm:$0xff]
  %v45 = vld [vmem:[#allocation2 + $0x48] sm:$0xff]
  %v46 = vld [vmem:[#allocation2 + $0x50] sm:$0xff]
  %v47 = vld [vmem:[#allocation2 + $0x58] sm:$0xff]
  %v48 = vld [vmem:[#allocation2 + $0x60] sm:$0xff]
  %v49 = vld [vmem:[#allocation2 + $0x68] sm:$0xff]
  %v50 = vld [vmem:[#allocation2 + $0x70] sm:$0xff]
  %v51 = vld [vmem:[#allocation2 + $0x78] sm:$0xff]
  %v52 = vld [vmem:[%s0] sm:$0xff]
  %v53 = vld [vmem:[%s0 + $0x8] sm:$0xff]
  %v54 = vld [vmem:[%s0 + $0x10] sm:$0xff]
  %v55 = vld [vmem:[%s0 + $0x18] sm:$0xff]
  %v56 = vld [vmem:[%s0 + $0x20] sm:$0xff]
  %v57 = vld [vmem:[%s0 + $0x28] sm:$0xff]
  %v58 = vld [vmem:[%s0 + $0x30] sm:$0xff]
  %v59 = vld [vmem:[%s0 + $0x38] sm:$0xff]
  %v60 = vld [vmem:[%s0 + $0x40] sm:$0xff]
  %v61 = vld [vmem:[%s0 + $0x48] sm:$0xff]
  %v62 = vld [vmem:[%s0 + $0x50] sm:$0xff]
  %v63 = vld [vmem:[%s0 + $0x58] sm:$0xff]
  %v64 = vld [vmem:[%s0 + $0x60] sm:$0xff]
  %v65 = vld [vmem:[%s0 + $0x68] sm:$0xff]
  %v66 = vld [vmem:[%s0 + $0x70] sm:$0xff]
  %v67 = vld [vmem:[%s0 + $0x78] sm:$0xff]
  %v68 = vpack.c.bf16 %v53, %v52
  %v69 = vpack.c.bf16 %v55, %v54
  %v70 = vpack.c.bf16 %v57, %v56
  %v71 = vpack.c.bf16 %v59, %v58
  %v72 = vpack.c.bf16 %v61, %v60
  %v73 = vpack.c.bf16 %v63, %v62
  %v74 = vpack.c.bf16 %v65, %v64
  %v75 = vpack.c.bf16 %v67, %v66
  %v76 = vld [vmem:[%s1] sm:$0xf]
  %v77 = vld [vmem:[%s1 + $0x4] sm:$0x3]
  %v80 = vunpack.c.l.b16 %v76
  %v81 = vunpack.c.l.b16 %v77
  %v82 = vpack.c.b16 %v81, %v80
  %vm83 = vcmask 97280
  %v85 = vsel %vm83, %v68, 0
  %v88 = vsel %vm83, %v69, 0
  %v91 = vsel %vm83, %v70, 0
  %v94 = vsel %vm83, %v71, 0
  %v97 = vsel %vm83, %v72, 0
  %v100 = vsel %vm83, %v73, 0
  %v103 = vsel %vm83, %v74, 0
  %v106 = vsel %vm83, %v75, 0
  %vm108 = vcmask 1045504
  %v110 = vsel %vm108, %v82, 0
  %112 = vmatprep.subr.bf16.mxu0 0
  %113 = vmatpush1.bf16.msra.mxu0 %v110
  %114 = vmatprep.subr.bf16.mxu0 0
  %115 = vmatpush1.bf16.msra.mxu0 0
  %116 = vmatprep.subr.bf16.mxu0 0
  %117 = vmatpush1.bf16.msra.mxu0 0
  %118 = vmatprep.subr.bf16.mxu0 0
  %119 = vmatpush1.bf16.msra.mxu0 0
  %120 = vmatprep.subr.bf16.mxu0 0
  %121 = vmatpush1.bf16.msra.mxu0 0
  %122 = vmatprep.subr.bf16.mxu0 0
  %123 = vmatpush1.bf16.msra.mxu0 0
  %124 = vmatprep.subr.bf16.mxu0 0
  %125 = vmatpush1.bf16.msra.mxu0 0
  %126 = vmatprep.subr.bf16.mxu0 0
  %127 = vmatpush1.bf16.msra.mxu0 0
  %128 = vmatprep.subr.bf16.mxu0 0
  %129 = vmatpush1.bf16.msra.mxu0 0
  %130 = vmatprep.subr.bf16.mxu0 0
  %131 = vmatpush1.bf16.msra.mxu0 0
  %132 = vmatprep.subr.bf16.mxu0 0
  %133 = vmatpush1.bf16.msra.mxu0 0
  %134 = vmatprep.subr.bf16.mxu0 0
  %135 = vmatpush1.bf16.msra.mxu0 0
  %136 = vmatprep.subr.bf16.mxu0 0
  %137 = vmatpush1.bf16.msra.mxu0 0
  %138 = vmatprep.subr.bf16.mxu0 0
  %139 = vmatpush1.bf16.msra.mxu0 0
  %140 = vmatprep.subr.bf16.mxu0 0
  %141 = vmatpush1.bf16.msra.mxu0 0
  %142 = vmatprep.subr.bf16.mxu0 0
  %143 = vmatpush1.bf16.msra.mxu0 0
  %144 = vmatprep.mubr.bf16.mxu0 0
  %145 = vmatmul.mubr.bf16.gmra.mrb[0].mxu0 %v85
  %v146 = vpop.f32.mrb[0].mxu0
  %v147 = vadd.f32 0.0, %v146
  %v148 = vpop.f32.mrb[0].mxu0
  %v149 = vpop.f32.mrb[0].mxu0
  %v150 = vadd.f32 0.0, %v149
  %v151 = vpop.f32.mrb[0].mxu0
  %152 = vmatprep.mubr.bf16.mxu0 0
  %153 = vmatmul.mubr.bf16.gmra.mrb[0].mxu0 %v88
  %v154 = vpop.f32.mrb[0].mxu0
  %v155 = vadd.f32 0.0, %v154
  %v156 = vpop.f32.mrb[0].mxu0
  %v157 = vpop.f32.mrb[0].mxu0
  %v158 = vadd.f32 0.0, %v157
  %v159 = vpop.f32.mrb[0].mxu0
  %160 = vmatprep.mubr.bf16.mxu0 0
  %161 = vmatmul.mubr.bf16.gmra.mrb[0].mxu0 %v91
  %v162 = vpop.f32.mrb[0].mxu0
  %v163 = vadd.f32 0.0, %v162
  %v164 = vpop.f32.mrb[0].mxu0
  %v165 = vpop.f32.mrb[0].mxu0
  %v166 = vadd.f32 0.0, %v165
  %v167 = vpop.f32.mrb[0].mxu0
  %168 = vmatprep.mubr.bf16.mxu0 0
  %169 = vmatmul.mubr.bf16.gmra.mrb[0].mxu0 %v94
  %v170 = vpop.f32.mrb[0].mxu0
  %v171 = vadd.f32 0.0, %v170
  %v172 = vpop.f32.mrb[0].mxu0
  %v173 = vpop.f32.mrb[0].mxu0
  %v174 = vadd.f32 0.0, %v173
  %v175 = vpop.f32.mrb[0].mxu0
  %176 = vmatprep.mubr.bf16.mxu0 0
  %177 = vmatmul.mubr.bf16.gmra.mrb[0].mxu0 %v97
  %v178 = vpop.f32.mrb[0].mxu0
  %v179 = vadd.f32 0.0, %v178
  %v180 = vpop.f32.mrb[0].mxu0
  %v181 = vpop.f32.mrb[0].mxu0
  %v182 = vadd.f32 0.0, %v181
  %v183 = vpop.f32.mrb[0].mxu0
  %184 = vmatprep.mubr.bf16.mxu0 0
  %185 = vmatmul.mubr.bf16.gmra.mrb[0].mxu0 %v100
  %v186 = vpop.f32.mrb[0].mxu0
  %v187 = vadd.f32 0.0, %v186
  %v188 = vpop.f32.mrb[0].mxu0
  %v189 = vpop.f32.mrb[0].mxu0
  %v190 = vadd.f32 0.0, %v189
  %v191 = vpop.f32.mrb[0].mxu0
  %192 = vmatprep.mubr.bf16.mxu0 0
  %193 = vmatmul.mubr.bf16.gmra.mrb[0].mxu0 %v103
  %v194 = vpop.f32.mrb[0].mxu0
  %v195 = vadd.f32 0.0, %v194
  %v196 = vpop.f32.mrb[0].mxu0
  %v197 = vpop.f32.mrb[0].mxu0
  %v198 = vadd.f32 0.0, %v197
  %v199 = vpop.f32.mrb[0].mxu0
  %200 = vmatprep.mubr.bf16.mxu0 0
  %201 = vmatmul.mubr.bf16.gmra.mrb[0].mxu0 %v106
  %v202 = vpop.f32.mrb[0].mxu0
  %v203 = vadd.f32 0.0, %v202
  %v204 = vpop.f32.mrb[0].mxu0
  %v205 = vpop.f32.mrb[0].mxu0
  %v206 = vadd.f32 0.0, %v205
  %v207 = vpop.f32.mrb[0].mxu0
  %208 = vdwg.mxu0
  %v209 = vadd.f32 %v36, %v147
  %v210 = vadd.f32 %v37, %v150
  %v211 = vadd.f32 %v38, %v155
  %v212 = vadd.f32 %v39, %v158
  %v213 = vadd.f32 %v40, %v163
  %v214 = vadd.f32 %v41, %v166
  %v215 = vadd.f32 %v42, %v171
  %v216 = vadd.f32 %v43, %v174
  %v217 = vadd.f32 %v44, %v179
  %v218 = vadd.f32 %v45, %v182
  %v219 = vadd.f32 %v46, %v187
  %v220 = vadd.f32 %v47, %v190
  %v221 = vadd.f32 %v48, %v195
  %v222 = vadd.f32 %v49, %v198
  %v223 = vadd.f32 %v50, %v203
  %v224 = vadd.f32 %v51, %v206
  %vm225 = vcmask 261120
  %226 = vst.msk [vmem:[#allocation2] sm:$0xff] %vm225, %v209
  %227 = vst.msk [vmem:[#allocation2 + $0x8] sm:$0xff] %vm225, %v210
  %228 = vst.msk [vmem:[#allocation2 + $0x10] sm:$0xff] %vm225, %v211
  %229 = vst.msk [vmem:[#allocation2 + $0x18] sm:$0xff] %vm225, %v212
  %230 = vst.msk [vmem:[#allocation2 + $0x20] sm:$0xff] %vm225, %v213
  %231 = vst.msk [vmem:[#allocation2 + $0x28] sm:$0xff] %vm225, %v214
  %232 = vst.msk [vmem:[#allocation2 + $0x30] sm:$0xff] %vm225, %v215
  %233 = vst.msk [vmem:[#allocation2 + $0x38] sm:$0xff] %vm225, %v216
  %234 = vst.msk [vmem:[#allocation2 + $0x40] sm:$0xff] %vm225, %v217
  %235 = vst.msk [vmem:[#allocation2 + $0x48] sm:$0xff] %vm225, %v218
  %236 = vst.msk [vmem:[#allocation2 + $0x50] sm:$0xff] %vm225, %v219
  %237 = vst.msk [vmem:[#allocation2 + $0x58] sm:$0xff] %vm225, %v220
  %238 = vst.msk [vmem:[#allocation2 + $0x60] sm:$0xff] %vm225, %v221
  %239 = vst.msk [vmem:[#allocation2 + $0x68] sm:$0xff] %vm225, %v222
  %240 = vst.msk [vmem:[#allocation2 + $0x70] sm:$0xff] %vm225, %v223
  %241 = vst.msk [vmem:[#allocation2 + $0x78] sm:$0xff] %vm225, %v224
  // Predicated region
  $region18: #{tpu_custom_call.1} parent=0 // pred_check
    %p242 = pneg %p15
  $region19: #{tpu_custom_call.1} parent=0 // pred_check_branch
    %244 = sbr.rel (%p242) target = $region21
  $region20: #{tpu_custom_call.1} parent=0 // pred_region
    %v245 = vld [vmem:[#allocation2] sm:$0xff]
    %v246 = vld [vmem:[#allocation2 + $0x8] sm:$0xff]
    %v247 = vld [vmem:[#allocation2 + $0x10] sm:$0xff]
    %v248 = vld [vmem:[#allocation2 + $0x18] sm:$0xff]
    %v249 = vld [vmem:[#allocation2 + $0x20] sm:$0xff]
    %v250 = vld [vmem:[#allocation2 + $0x28] sm:$0xff]
    %v251 = vld [vmem:[#allocation2 + $0x30] sm:$0xff]
    %v252 = vld [vmem:[#allocation2 + $0x38] sm:$0xff]
    %v253 = vld [vmem:[#allocation2 + $0x40] sm:$0xff]
    %v254 = vld [vmem:[#allocation2 + $0x48] sm:$0xff]
    %v255 = vld [vmem:[#allocation2 + $0x50] sm:$0xff]
    %v256 = vld [vmem:[#allocation2 + $0x58] sm:$0xff]
    %v257 = vld [vmem:[#allocation2 + $0x60] sm:$0xff]
    %v258 = vld [vmem:[#allocation2 + $0x68] sm:$0xff]
    %v259 = vld [vmem:[#allocation2 + $0x70] sm:$0xff]
    %v260 = vld [vmem:[#allocation2 + $0x78] sm:$0xff]
    %v261 = vld [vmem:[%s2] sm:$0x1]
    %v263 = vlaneseq
    %v264 = vshrl.u32 %v263, 7
    %v265 = vsub.s32 0, %v264
    %v266 = vrot.slane %v261, %v265
    %v268 = vadd.f32 %v245, %v266
    %v269 = vadd.f32 %v246, %v266
    %v270 = vadd.f32 %v247, %v266
    %v271 = vadd.f32 %v248, %v266
    %v272 = vadd.f32 %v249, %v266
    %v273 = vadd.f32 %v250, %v266
    %v274 = vadd.f32 %v251, %v266
    %v275 = vadd.f32 %v252, %v266
    %v276 = vadd.f32 %v253, %v266
    %v277 = vadd.f32 %v254, %v266
    %v278 = vadd.f32 %v255, %v266
    %v279 = vadd.f32 %v256, %v266
    %v280 = vadd.f32 %v257, %v266
    %v281 = vadd.f32 %v258, %v266
    %v282 = vadd.f32 %v259, %v266
    %v283 = vadd.f32 %v260, %v266
    %284 = vst.msk [vmem:[%s3] sm:$0xff] %vm225, %v268
    %285 = vst.msk [vmem:[%s3 + $0x8] sm:$0xff] %vm225, %v269
    %286 = vst.msk [vmem:[%s3 + $0x10] sm:$0xff] %vm225, %v270
    %287 = vst.msk [vmem:[%s3 + $0x18] sm:$0xff] %vm225, %v271
    %288 = vst.msk [vmem:[%s3 + $0x20] sm:$0xff] %vm225, %v272
    %289 = vst.msk [vmem:[%s3 + $0x28] sm:$0xff] %vm225, %v273
    %290 = vst.msk [vmem:[%s3 + $0x30] sm:$0xff] %vm225, %v274
    %291 = vst.msk [vmem:[%s3 + $0x38] sm:$0xff] %vm225, %v275
    %292 = vst.msk [vmem:[%s3 + $0x40] sm:$0xff] %vm225, %v276
    %293 = vst.msk [vmem:[%s3 + $0x48] sm:$0xff] %vm225, %v277
    %294 = vst.msk [vmem:[%s3 + $0x50] sm:$0xff] %vm225, %v278
    %295 = vst.msk [vmem:[%s3 + $0x58] sm:$0xff] %vm225, %v279
    %296 = vst.msk [vmem:[%s3 + $0x60] sm:$0xff] %vm225, %v280
    %297 = vst.msk [vmem:[%s3 + $0x68] sm:$0xff] %vm225, %v281
    %298 = vst.msk [vmem:[%s3 + $0x70] sm:$0xff] %vm225, %v282
    %299 = vst.msk [vmem:[%s3 + $0x78] sm:$0xff] %vm225, %v283
  $region21: #{tpu_custom_call.1} parent=0 // pred_fallthru
    _
  // Predicated region
  $region22: #{tpu_custom_call.1} parent=0 // pred_check
    _
  $region23: #{tpu_custom_call.1} parent=0 // pred_check_branch
    %301 = sbr.rel (0) target = $region25
  $region24: #{tpu_custom_call.1} parent=0 // pred_region
    _
  $region25: #{tpu_custom_call.1} parent=0 // pred_fallthru
    _
  // Predicated region
  $region26: #{tpu_custom_call.1} parent=0 // pred_check
    _
  $region27: #{tpu_custom_call.1} parent=0 // pred_check_branch
    %303 = sbr.rel (0) target = $region29
  $region28: #{tpu_custom_call.1} parent=0 // pred_region
    _
  $region29: #{tpu_custom_call.1} parent=0 // pred_fallthru
    _

</llo_original>
